<compile_context>
chip_gen: v7x
topology: tpu7x:2x2x1
jax: 0.10.0
libtpu: 0.0.40
codegen_flags: <defaults>
</compile_context>

<pallas_src>
import jax
import jax.numpy as jnp
import numpy as np
from jax import lax
from jax.experimental import pallas as pl
from jax.experimental.pallas import tpu as pltpu


def _gru_chunk_kernel(gi_ref, h0_ref, whh_ref, bhn_ref, out_ref, h_carry):
    """One T-chunk of the GRU recurrence.

    gi_ref : (Tc, 3, B, H) bf16  gate-major precomputed x_t @ W_ih^T + b_ih (+ b_hr/b_hz folded)
    h0_ref : (B, H) f32          initial hidden state (used only at chunk 0)
    whh_ref: (3, H, H) bf16      gate-major W_hh^T  (whh_ref[g] == W_hg^T)
    bhn_ref: (1, H) f32          n-gate hidden bias b_hn (must stay inside r * (...))
    out_ref: (Tc, B, H)          per-timestep hidden states for this chunk
    h_carry: (B, H) f32 VMEM     hidden state carried across grid steps
    """
    @pl.when(pl.program_id(0) == 0)
    def _():
        h_carry[...] = h0_ref[...].astype(jnp.float32)

    Tc = gi_ref.shape[0]

    # Loop-invariant loads hoisted off the serial critical path.
    whh_r = whh_ref[0]                        # (H, H) bf16
    whh_z = whh_ref[1]
    whh_n = whh_ref[2]
    bhn = bhn_ref[...].astype(jnp.float32)    # (1, H)

    def step(t, h_prev):
        # Gate-major loads: major-dim indexing only, no cross-lane slicing.
        gi_r = gi_ref[t, 0].astype(jnp.float32)   # (B, H)
        gi_z = gi_ref[t, 1].astype(jnp.float32)
        gi_n = gi_ref[t, 2].astype(jnp.float32)

        # bf16 MXU matmuls with f32 accumulation; gate math stays f32.
        h_bf = h_prev.astype(jnp.bfloat16)
        gh_r = jnp.dot(h_bf, whh_r, preferred_element_type=jnp.float32)
        gh_z = jnp.dot(h_bf, whh_z, preferred_element_type=jnp.float32)
        gh_n = jnp.dot(h_bf, whh_n, preferred_element_type=jnp.float32)

        r = jax.nn.sigmoid(gi_r + gh_r)
        z = jax.nn.sigmoid(gi_z + gh_z)
        n = jnp.tanh(gi_n + r * (gh_n + bhn))     # PyTorch GRU: b_hn inside r * (.)
        h_new = (1.0 - z) * n + z * h_prev

        out_ref[t] = h_new.astype(out_ref.dtype)
        return h_new

    # Capped unroll: LLO scheduling visibility without vreg pressure at large Tc.
    h_last = lax.fori_loop(0, Tc, step, h_carry[...], unroll=min(Tc, 8))
    h_carry[...] = h_last


def encoder_rnn_forward(x, h0, w_ih, w_hh, b_ih, b_hh, *, t_chunk=None):
    """GRU forward matching torch.nn.GRU (1 layer, unidirectional).

    x: (T, B, I) time-major; h0: (1, B, H).
    Weights in PyTorch layout: w_ih (3H, I), w_hh (3H, H), biases (3H,), gate order (r, z, n).
    Returns (output (T, B, H), hidden (1, B, H)).
    NOTE: nn.GRU(dropout=p) with num_layers=1 has no effect on the forward pass.
    """
    T, B, I = x.shape
    H = h0.shape[-1]
    f32 = jnp.float32

    # ---- Hoisted, time-parallel input projection: one big matmul done by XLA ----
    # Fold the r/z hidden biases into gi (they commute with the sigmoid-argument sum);
    # the n-gate hidden bias does NOT fold (it is multiplied by r) and stays in the kernel.
    bias_fold = b_ih.astype(f32) + jnp.concatenate(
        [b_hh[: 2 * H].astype(f32), jnp.zeros((H,), f32)])
    gi = x.reshape(T * B, I).astype(f32) @ w_ih.astype(f32).T + bias_fold        # (T*B, 3H)
    # Gate-major (T, 3, B, H), stored bf16 (dominant HBM/VMEM operand).
    gi = gi.reshape(T, B, 3, H).transpose(0, 2, 1, 3).astype(jnp.bfloat16)       # (T, 3, B, H)

    # Gate-major W_hh^T: whh_gm[g] = W_hg^T, bf16 for the MXU.
    whh_gm = jnp.transpose(w_hh.reshape(3, H, H), (0, 2, 1)).astype(jnp.bfloat16)  # (3, H, H)
    bhn = b_hh[2 * H:].reshape(1, H).astype(f32)
    h0_2d = h0.reshape(B, H).astype(f32)

    # ---- T-chunked grid: stream gi/out per chunk; carry h in VMEM scratch across chunks ----
    if t_chunk is None:
        # ~4 MiB per-chunk budget (x2 double-buffered by Pallas) keeps VMEM comfortable even on
        # v7x (64 MiB physical / 32 MiB default scoped).  At toy shapes this resolves to T.
        budget = 4 * 1024 * 1024
        per_t = 3 * B * H * 2 + B * H * jnp.dtype(x.dtype).itemsize
        t_chunk = max(1, min(T, budget // max(per_t, 1)))
    while T % t_chunk != 0:
        t_chunk -= 1
    grid = (T // t_chunk,)

    out = pl.pallas_call(
        _gru_chunk_kernel,
        out_shape=jax.ShapeDtypeStruct((T, B, H), x.dtype),
        grid_spec=pltpu.PrefetchScalarGridSpec(
            num_scalar_prefetch=0,
            grid=grid,
            in_specs=[
                pl.BlockSpec((t_chunk, 3, B, H), lambda c: (c, 0, 0, 0)),  # gi chunk (bf16)
                pl.BlockSpec((B, H), lambda c: (0, 0)),                    # h0
                pl.BlockSpec((3, H, H), lambda c: (0, 0, 0)),              # W_hh^T gate-major (bf16)
                pl.BlockSpec((1, H), lambda c: (0, 0)),                    # b_hn
            ],
            out_specs=pl.BlockSpec((t_chunk, B, H), lambda c: (c, 0, 0)),
            scratch_shapes=[pltpu.VMEM((B, H), jnp.float32)],              # h carried across chunks
        ),
        compiler_params=pltpu.CompilerParams(
            dimension_semantics=("arbitrary",),   # recurrence: chunks are strictly sequential
        ),
    )(gi, h0_2d, whh_gm, bhn)

    hidden = out[T - 1:]   # (1, B, H): final hidden == last output for a 1-layer GRU
    return out, hidden


def gru_reference(x, h0, w_ih, w_hh, b_ih, b_hh):
    """Pure-JAX f32 reference matching torch.nn.GRU forward."""
    H = h0.shape[-1]

    def step(h, x_t):
        gi = x_t @ w_ih.T + b_ih
        gh = h @ w_hh.T + b_hh
        i_r, i_z, i_n = gi[:, :H], gi[:, H:2 * H], gi[:, 2 * H:]
        h_r, h_z, h_n = gh[:, :H], gh[:, H:2 * H], gh[:, 2 * H:]
        r = jax.nn.sigmoid(i_r + h_r)
        z = jax.nn.sigmoid(i_z + h_z)
        n = jnp.tanh(i_n + r * h_n)
        h_new = (1.0 - z) * n + z * h
        return h_new, h_new

    h_last, outs = jax.lax.scan(step, h0[0], x)
    return outs, h_last[None]


if __name__ == "__main__":
    # Small shapes consistent with the module's forward: seq=8, batch=2, input=16, hidden=32.
    T, B, I, H = 8, 2, 16, 32
    dtype = jnp.float32

    key = jax.random.PRNGKey(0)
    k_x, k_h, k1, k2, k3, k4 = jax.random.split(key, 6)

    # PyTorch nn.GRU-style init: U(-1/sqrt(H), 1/sqrt(H)).
    bound = 1.0 / np.sqrt(H)
    w_ih = jax.random.uniform(k1, (3 * H, I), dtype, -bound, bound)
    w_hh = jax.random.uniform(k2, (3 * H, H), dtype, -bound, bound)
    b_ih = jax.random.uniform(k3, (3 * H,), dtype, -bound, bound)
    b_hh = jax.random.uniform(k4, (3 * H,), dtype, -bound, bound)

    x = jax.random.normal(k_x, (T, B, I), dtype)      # (seq, batch, input_size)
    h0 = jax.random.normal(k_h, (1, B, H), dtype)     # (1, batch, hidden_size)

    # t_chunk=4 -> grid of 2 chunks, exercising the VMEM hidden-state carry across grid steps.
    out, h_last = encoder_rnn_forward(x, h0, w_ih, w_hh, b_ih, b_hh, t_chunk=4)
    out = jax.block_until_ready(out)
    h_last = jax.block_until_ready(h_last)

    out_ref, h_ref = gru_reference(x, h0, w_ih, w_hh, b_ih, b_hh)
    # bf16 gi storage + bf16 MXU operands -> expected quantization vs f32 reference.
    np.testing.assert_allclose(np.asarray(out), np.asarray(out_ref), rtol=2e-2, atol=2e-2)
    np.testing.assert_allclose(np.asarray(h_last), np.asarray(h_ref), rtol=2e-2, atol=2e-2)

    assert out.shape == (T, B, H) and h_last.shape == (1, B, H)
    print("KERNEL_OK")
</pallas_src>

<mosaic_0001>
module attributes {stable_mosaic.version = 11 : i64} {
  func.func @_gru_chunk_kernel(%arg0: i32, %arg1: memref<4x3x2x32xbf16, #tpu.memory_space<vmem>>, %arg2: memref<2x32xf32, #tpu.memory_space<vmem>>, %arg3: memref<3x32x32xbf16, #tpu.memory_space<vmem>>, %arg4: memref<1x32xf32, #tpu.memory_space<vmem>>, %arg5: memref<4x2x32xf32, #tpu.memory_space<vmem>>, %arg6: memref<2x32xf32, #tpu.memory_space<vmem>>) attributes {dimension_semantics = [#tpu.dimension_semantics<arbitrary>], iteration_bounds = array<i64: 2>, scalar_prefetch = 0 : i64, scratch_operands = 1 : i64, tpu.core_type = #tpu.core_type<tc>, window_params = [{transform_indices = @transform_0, window_bounds = array<i64: 4, 3, 2, 32>}, {pipeline_mode = #tpu.pipeline_mode<synchronous>, transform_indices = @transform_1, window_bounds = array<i64: 2, 32>}, {pipeline_mode = #tpu.pipeline_mode<synchronous>, transform_indices = @transform_2, window_bounds = array<i64: 3, 32, 32>}, {pipeline_mode = #tpu.pipeline_mode<synchronous>, transform_indices = @transform_3, window_bounds = array<i64: 1, 32>}, {transform_indices = @transform_4, window_bounds = array<i64: 4, 2, 32>}]} {
    %c0_i32 = arith.constant 0 : i32
    %0 = arith.cmpi eq, %arg0, %c0_i32 : i32
    %1 = arith.extui %0 : i1 to i32
    %c0_i32_0 = arith.constant 0 : i32
    %2 = arith.cmpi ne, %1, %c0_i32_0 : i32
    scf.if %2 {
      %c0_81 = arith.constant 0 : index
      %c0_82 = arith.constant 0 : index
      %180 = vector.load %arg2[%c0_81, %c0_82] : memref<2x32xf32, #tpu.memory_space<vmem>>, vector<2x32xf32>
      %c0_83 = arith.constant 0 : index
      %c0_84 = arith.constant 0 : index
      %181 = vector.load %arg6[%c0_83, %c0_84] : memref<2x32xf32, #tpu.memory_space<vmem>>, vector<2x32xf32>
      tpu.vector_store %arg6[%c0_83, %c0_84], %180 {strides = array<i32>} : memref<2x32xf32, #tpu.memory_space<vmem>>, vector<2x32xf32>,
    } else {
    }
    %c0 = arith.constant 0 : index
    %c0_1 = arith.constant 0 : index
    %c0_2 = arith.constant 0 : index
    %3 = vector.load %arg3[%c0, %c0_1, %c0_2] : memref<3x32x32xbf16, #tpu.memory_space<vmem>>, vector<1x32x32xbf16>
    %4 = vector.shape_cast %3 : vector<1x32x32xbf16> to vector<32x32xbf16>
    %c1 = arith.constant 1 : index
    %c0_3 = arith.constant 0 : index
    %c0_4 = arith.constant 0 : index
    %5 = vector.load %arg3[%c1, %c0_3, %c0_4] : memref<3x32x32xbf16, #tpu.memory_space<vmem>>, vector<1x32x32xbf16>
    %6 = vector.shape_cast %5 : vector<1x32x32xbf16> to vector<32x32xbf16>
    %c2 = arith.constant 2 : index
    %c0_5 = arith.constant 0 : index
    %c0_6 = arith.constant 0 : index
    %7 = vector.load %arg3[%c2, %c0_5, %c0_6] : memref<3x32x32xbf16, #tpu.memory_space<vmem>>, vector<1x32x32xbf16>
    %8 = vector.shape_cast %7 : vector<1x32x32xbf16> to vector<32x32xbf16>
    %c0_7 = arith.constant 0 : index
    %c0_8 = arith.constant 0 : index
    %9 = vector.load %arg4[%c0_7, %c0_8] : memref<1x32xf32, #tpu.memory_space<vmem>>, vector<1x32xf32>
    %c0_9 = arith.constant 0 : index
    %c0_10 = arith.constant 0 : index
    %10 = vector.load %arg6[%c0_9, %c0_10] : memref<2x32xf32, #tpu.memory_space<vmem>>, vector<2x32xf32>
    %c0_i32_11 = arith.constant 0 : i32
    %11 = arith.index_cast %c0_i32_11 : i32 to index
    %c0_12 = arith.constant 0 : index
    %c0_13 = arith.constant 0 : index
    %c0_14 = arith.constant 0 : index
    %12 = vector.load %arg1[%11, %c0_12, %c0_13, %c0_14] : memref<4x3x2x32xbf16, #tpu.memory_space<vmem>>, vector<1x1x2x32xbf16>
    %13 = vector.shape_cast %12 : vector<1x1x2x32xbf16> to vector<2x32xbf16>
    %14 = arith.extf %13 : vector<2x32xbf16> to vector<2x32xf32>
    %15 = arith.index_cast %c0_i32_11 : i32 to index
    %c1_15 = arith.constant 1 : index
    %c0_16 = arith.constant 0 : index
    %c0_17 = arith.constant 0 : index
    %16 = vector.load %arg1[%15, %c1_15, %c0_16, %c0_17] : memref<4x3x2x32xbf16, #tpu.memory_space<vmem>>, vector<1x1x2x32xbf16>
    %17 = vector.shape_cast %16 : vector<1x1x2x32xbf16> to vector<2x32xbf16>
    %18 = arith.extf %17 : vector<2x32xbf16> to vector<2x32xf32>
    %19 = arith.index_cast %c0_i32_11 : i32 to index
    %c2_18 = arith.constant 2 : index
    %c0_19 = arith.constant 0 : index
    %c0_20 = arith.constant 0 : index
    %20 = vector.load %arg1[%19, %c2_18, %c0_19, %c0_20] : memref<4x3x2x32xbf16, #tpu.memory_space<vmem>>, vector<1x1x2x32xbf16>
    %21 = vector.shape_cast %20 : vector<1x1x2x32xbf16> to vector<2x32xbf16>
    %22 = arith.extf %21 : vector<2x32xbf16> to vector<2x32xf32>
    %23 = arith.truncf %10 : vector<2x32xf32> to vector<2x32xbf16>
    %cst = arith.constant dense<0.000000e+00> : vector<2x32xf32>
    %24 = tpu.matmul %23, %4, %cst {dimension_numbers = #tpu.dot_dimension_numbers<[1], [0], [0], [1], [0, 0, 1, 1], [], []>} : vector<2x32xbf16>, vector<32x32xbf16>, vector<2x32xf32> -> vector<2x32xf32>
    %cst_21 = arith.constant dense<0.000000e+00> : vector<2x32xf32>
    %25 = tpu.matmul %23, %6, %cst_21 {dimension_numbers = #tpu.dot_dimension_numbers<[1], [0], [0], [1], [0, 0, 1, 1], [], []>} : vector<2x32xbf16>, vector<32x32xbf16>, vector<2x32xf32> -> vector<2x32xf32>
    %cst_22 = arith.constant dense<0.000000e+00> : vector<2x32xf32>
    %26 = tpu.matmul %23, %8, %cst_22 {dimension_numbers = #tpu.dot_dimension_numbers<[1], [0], [0], [1], [0, 0, 1, 1], [], []>} : vector<2x32xbf16>, vector<32x32xbf16>, vector<2x32xf32> -> vector<2x32xf32>
    %27 = arith.addf %14, %24 : vector<2x32xf32>
    %28 = arith.negf %27 : vector<2x32xf32>
    %29 = math.exp %28 : vector<2x32xf32>
    %cst_23 = arith.constant 1.000000e+00 : f32
    %30 = vector.broadcast %cst_23 : f32 to vector<2x32xf32>
    %31 = arith.addf %30, %29 : vector<2x32xf32>
    %32 = arith.divf %30, %31 : vector<2x32xf32>
    %33 = arith.addf %18, %25 : vector<2x32xf32>
    %34 = arith.negf %33 : vector<2x32xf32>
    %35 = math.exp %34 : vector<2x32xf32>
    %cst_24 = arith.constant 1.000000e+00 : f32
    %36 = vector.broadcast %cst_24 : f32 to vector<2x32xf32>
    %37 = arith.addf %36, %35 : vector<2x32xf32>
    %38 = arith.divf %36, %37 : vector<2x32xf32>
    %39 = vector.broadcast %9 : vector<1x32xf32> to vector<2x32xf32>
    %40 = arith.addf %26, %39 : vector<2x32xf32>
    %41 = arith.mulf %32, %40 : vector<2x32xf32>
    %42 = arith.addf %22, %41 : vector<2x32xf32>
    %43 = math.tanh %42 : vector<2x32xf32>
    %cst_25 = arith.constant 1.000000e+00 : f32
    %44 = vector.broadcast %cst_25 : f32 to vector<2x32xf32>
    %45 = arith.subf %44, %38 : vector<2x32xf32>
    %46 = arith.mulf %45, %43 : vector<2x32xf32>
    %47 = arith.mulf %38, %10 : vector<2x32xf32>
    %48 = arith.addf %46, %47 : vector<2x32xf32>
    %49 = arith.index_cast %c0_i32_11 : i32 to index
    %c0_26 = arith.constant 0 : index
    %c0_27 = arith.constant 0 : index
    %50 = vector.load %arg5[%49, %c0_26, %c0_27] : memref<4x2x32xf32, #tpu.memory_space<vmem>>, vector<1x2x32xf32>
    %51 = vector.shape_cast %50 : vector<1x2x32xf32> to vector<2x32xf32>
    %52 = vector.shape_cast %48 : vector<2x32xf32> to vector<1x2x32xf32>
    tpu.vector_store %arg5[%49, %c0_26, %c0_27], %52 {strides = array<i32>} : memref<4x2x32xf32, #tpu.memory_space<vmem>>, vector<1x2x32xf32>,
    %c1_i32 = arith.constant 1 : i32
    %53 = arith.index_cast %c1_i32 : i32 to index
    %c0_28 = arith.constant 0 : index
    %c0_29 = arith.constant 0 : index
    %c0_30 = arith.constant 0 : index
    %54 = vector.load %arg1[%53, %c0_28, %c0_29, %c0_30] : memref<4x3x2x32xbf16, #tpu.memory_space<vmem>>, vector<1x1x2x32xbf16>
    %55 = vector.shape_cast %54 : vector<1x1x2x32xbf16> to vector<2x32xbf16>
    %56 = arith.extf %55 : vector<2x32xbf16> to vector<2x32xf32>
    %57 = arith.index_cast %c1_i32 : i32 to index
    %c1_31 = arith.constant 1 : index
    %c0_32 = arith.constant 0 : index
    %c0_33 = arith.constant 0 : index
    %58 = vector.load %arg1[%57, %c1_31, %c0_32, %c0_33] : memref<4x3x2x32xbf16, #tpu.memory_space<vmem>>, vector<1x1x2x32xbf16>
    %59 = vector.shape_cast %58 : vector<1x1x2x32xbf16> to vector<2x32xbf16>
    %60 = arith.extf %59 : vector<2x32xbf16> to vector<2x32xf32>
    %61 = arith.index_cast %c1_i32 : i32 to index
    %c2_34 = arith.constant 2 : index
    %c0_35 = arith.constant 0 : index
    %c0_36 = arith.constant 0 : index
    %62 = vector.load %arg1[%61, %c2_34, %c0_35, %c0_36] : memref<4x3x2x32xbf16, #tpu.memory_space<vmem>>, vector<1x1x2x32xbf16>
    %63 = vector.shape_cast %62 : vector<1x1x2x32xbf16> to vector<2x32xbf16>
    %64 = arith.extf %63 : vector<2x32xbf16> to vector<2x32xf32>
    %65 = arith.truncf %48 : vector<2x32xf32> to vector<2x32xbf16>
    %cst_37 = arith.constant dense<0.000000e+00> : vector<2x32xf32>
    %66 = tpu.matmul %65, %4, %cst_37 {dimension_numbers = #tpu.dot_dimension_numbers<[1], [0], [0], [1], [0, 0, 1, 1], [], []>} : vector<2x32xbf16>, vector<32x32xbf16>, vector<2x32xf32> -> vector<2x32xf32>
    %cst_38 = arith.constant dense<0.000000e+00> : vector<2x32xf32>
    %67 = tpu.matmul %65, %6, %cst_38 {dimension_numbers = #tpu.dot_dimension_numbers<[1], [0], [0], [1], [0, 0, 1, 1], [], []>} : vector<2x32xbf16>, vector<32x32xbf16>, vector<2x32xf32> -> vector<2x32xf32>
    %cst_39 = arith.constant dense<0.000000e+00> : vector<2x32xf32>
    %68 = tpu.matmul %65, %8, %cst_39 {dimension_numbers = #tpu.dot_dimension_numbers<[1], [0], [0], [1], [0, 0, 1, 1], [], []>} : vector<2x32xbf16>, vector<32x32xbf16>, vector<2x32xf32> -> vector<2x32xf32>
    %69 = arith.addf %56, %66 : vector<2x32xf32>
    %70 = arith.negf %69 : vector<2x32xf32>
    %71 = math.exp %70 : vector<2x32xf32>
    %cst_40 = arith.constant 1.000000e+00 : f32
    %72 = vector.broadcast %cst_40 : f32 to vector<2x32xf32>
    %73 = arith.addf %72, %71 : vector<2x32xf32>
    %74 = arith.divf %72, %73 : vector<2x32xf32>
    %75 = arith.addf %60, %67 : vector<2x32xf32>
    %76 = arith.negf %75 : vector<2x32xf32>
    %77 = math.exp %76 : vector<2x32xf32>
    %cst_41 = arith.constant 1.000000e+00 : f32
    %78 = vector.broadcast %cst_41 : f32 to vector<2x32xf32>
    %79 = arith.addf %78, %77 : vector<2x32xf32>
    %80 = arith.divf %78, %79 : vector<2x32xf32>
    %81 = vector.broadcast %9 : vector<1x32xf32> to vector<2x32xf32>
    %82 = arith.addf %68, %81 : vector<2x32xf32>
    %83 = arith.mulf %74, %82 : vector<2x32xf32>
    %84 = arith.addf %64, %83 : vector<2x32xf32>
    %85 = math.tanh %84 : vector<2x32xf32>
    %cst_42 = arith.constant 1.000000e+00 : f32
    %86 = vector.broadcast %cst_42 : f32 to vector<2x32xf32>
    %87 = arith.subf %86, %80 : vector<2x32xf32>
    %88 = arith.mulf %87, %85 : vector<2x32xf32>
    %89 = arith.mulf %80, %48 : vector<2x32xf32>
    %90 = arith.addf %88, %89 : vector<2x32xf32>
    %91 = arith.index_cast %c1_i32 : i32 to index
    %c0_43 = arith.constant 0 : index
    %c0_44 = arith.constant 0 : index
    %92 = vector.load %arg5[%91, %c0_43, %c0_44] : memref<4x2x32xf32, #tpu.memory_space<vmem>>, vector<1x2x32xf32>
    %93 = vector.shape_cast %92 : vector<1x2x32xf32> to vector<2x32xf32>
    %94 = vector.shape_cast %90 : vector<2x32xf32> to vector<1x2x32xf32>
    tpu.vector_store %arg5[%91, %c0_43, %c0_44], %94 {strides = array<i32>} : memref<4x2x32xf32, #tpu.memory_space<vmem>>, vector<1x2x32xf32>,
    %c2_i32 = arith.constant 2 : i32
    %95 = arith.index_cast %c2_i32 : i32 to index
    %c0_45 = arith.constant 0 : index
    %c0_46 = arith.constant 0 : index
    %c0_47 = arith.constant 0 : index
    %96 = vector.load %arg1[%95, %c0_45, %c0_46, %c0_47] : memref<4x3x2x32xbf16, #tpu.memory_space<vmem>>, vector<1x1x2x32xbf16>
    %97 = vector.shape_cast %96 : vector<1x1x2x32xbf16> to vector<2x32xbf16>
    %98 = arith.extf %97 : vector<2x32xbf16> to vector<2x32xf32>
    %99 = arith.index_cast %c2_i32 : i32 to index
    %c1_48 = arith.constant 1 : index
    %c0_49 = arith.constant 0 : index
    %c0_50 = arith.constant 0 : index
    %100 = vector.load %arg1[%99, %c1_48, %c0_49, %c0_50] : memref<4x3x2x32xbf16, #tpu.memory_space<vmem>>, vector<1x1x2x32xbf16>
    %101 = vector.shape_cast %100 : vector<1x1x2x32xbf16> to vector<2x32xbf16>
    %102 = arith.extf %101 : vector<2x32xbf16> to vector<2x32xf32>
    %103 = arith.index_cast %c2_i32 : i32 to index
    %c2_51 = arith.constant 2 : index
    %c0_52 = arith.constant 0 : index
    %c0_53 = arith.constant 0 : index
    %104 = vector.load %arg1[%103, %c2_51, %c0_52, %c0_53] : memref<4x3x2x32xbf16, #tpu.memory_space<vmem>>, vector<1x1x2x32xbf16>
    %105 = vector.shape_cast %104 : vector<1x1x2x32xbf16> to vector<2x32xbf16>
    %106 = arith.extf %105 : vector<2x32xbf16> to vector<2x32xf32>
    %107 = arith.truncf %90 : vector<2x32xf32> to vector<2x32xbf16>
    %cst_54 = arith.constant dense<0.000000e+00> : vector<2x32xf32>
    %108 = tpu.matmul %107, %4, %cst_54 {dimension_numbers = #tpu.dot_dimension_numbers<[1], [0], [0], [1], [0, 0, 1, 1], [], []>} : vector<2x32xbf16>, vector<32x32xbf16>, vector<2x32xf32> -> vector<2x32xf32>
    %cst_55 = arith.constant dense<0.000000e+00> : vector<2x32xf32>
    %109 = tpu.matmul %107, %6, %cst_55 {dimension_numbers = #tpu.dot_dimension_numbers<[1], [0], [0], [1], [0, 0, 1, 1], [], []>} : vector<2x32xbf16>, vector<32x32xbf16>, vector<2x32xf32> -> vector<2x32xf32>
    %cst_56 = arith.constant dense<0.000000e+00> : vector<2x32xf32>
    %110 = tpu.matmul %107, %8, %cst_56 {dimension_numbers = #tpu.dot_dimension_numbers<[1], [0], [0], [1], [0, 0, 1, 1], [], []>} : vector<2x32xbf16>, vector<32x32xbf16>, vector<2x32xf32> -> vector<2x32xf32>
    %111 = arith.addf %98, %108 : vector<2x32xf32>
    %112 = arith.negf %111 : vector<2x32xf32>
    %113 = math.exp %112 : vector<2x32xf32>
    %cst_57 = arith.constant 1.000000e+00 : f32
    %114 = vector.broadcast %cst_57 : f32 to vector<2x32xf32>
    %115 = arith.addf %114, %113 : vector<2x32xf32>
    %116 = arith.divf %114, %115 : vector<2x32xf32>
    %117 = arith.addf %102, %109 : vector<2x32xf32>
    %118 = arith.negf %117 : vector<2x32xf32>
    %119 = math.exp %118 : vector<2x32xf32>
    %cst_58 = arith.constant 1.000000e+00 : f32
    %120 = vector.broadcast %cst_58 : f32 to vector<2x32xf32>
    %121 = arith.addf %120, %119 : vector<2x32xf32>
    %122 = arith.divf %120, %121 : vector<2x32xf32>
    %123 = vector.broadcast %9 : vector<1x32xf32> to vector<2x32xf32>
    %124 = arith.addf %110, %123 : vector<2x32xf32>
    %125 = arith.mulf %116, %124 : vector<2x32xf32>
    %126 = arith.addf %106, %125 : vector<2x32xf32>
    %127 = math.tanh %126 : vector<2x32xf32>
    %cst_59 = arith.constant 1.000000e+00 : f32
    %128 = vector.broadcast %cst_59 : f32 to vector<2x32xf32>
    %129 = arith.subf %128, %122 : vector<2x32xf32>
    %130 = arith.mulf %129, %127 : vector<2x32xf32>
    %131 = arith.mulf %122, %90 : vector<2x32xf32>
    %132 = arith.addf %130, %131 : vector<2x32xf32>
    %133 = arith.index_cast %c2_i32 : i32 to index
    %c0_60 = arith.constant 0 : index
    %c0_61 = arith.constant 0 : index
    %134 = vector.load %arg5[%133, %c0_60, %c0_61] : memref<4x2x32xf32, #tpu.memory_space<vmem>>, vector<1x2x32xf32>
    %135 = vector.shape_cast %134 : vector<1x2x32xf32> to vector<2x32xf32>
    %136 = vector.shape_cast %132 : vector<2x32xf32> to vector<1x2x32xf32>
    tpu.vector_store %arg5[%133, %c0_60, %c0_61], %136 {strides = array<i32>} : memref<4x2x32xf32, #tpu.memory_space<vmem>>, vector<1x2x32xf32>,
    %c3_i32 = arith.constant 3 : i32
    %137 = arith.index_cast %c3_i32 : i32 to index
    %c0_62 = arith.constant 0 : index
    %c0_63 = arith.constant 0 : index
    %c0_64 = arith.constant 0 : index
    %138 = vector.load %arg1[%137, %c0_62, %c0_63, %c0_64] : memref<4x3x2x32xbf16, #tpu.memory_space<vmem>>, vector<1x1x2x32xbf16>
    %139 = vector.shape_cast %138 : vector<1x1x2x32xbf16> to vector<2x32xbf16>
    %140 = arith.extf %139 : vector<2x32xbf16> to vector<2x32xf32>
    %141 = arith.index_cast %c3_i32 : i32 to index
    %c1_65 = arith.constant 1 : index
    %c0_66 = arith.constant 0 : index
    %c0_67 = arith.constant 0 : index
    %142 = vector.load %arg1[%141, %c1_65, %c0_66, %c0_67] : memref<4x3x2x32xbf16, #tpu.memory_space<vmem>>, vector<1x1x2x32xbf16>
    %143 = vector.shape_cast %142 : vector<1x1x2x32xbf16> to vector<2x32xbf16>
    %144 = arith.extf %143 : vector<2x32xbf16> to vector<2x32xf32>
    %145 = arith.index_cast %c3_i32 : i32 to index
    %c2_68 = arith.constant 2 : index
    %c0_69 = arith.constant 0 : index
    %c0_70 = arith.constant 0 : index
    %146 = vector.load %arg1[%145, %c2_68, %c0_69, %c0_70] : memref<4x3x2x32xbf16, #tpu.memory_space<vmem>>, vector<1x1x2x32xbf16>
    %147 = vector.shape_cast %146 : vector<1x1x2x32xbf16> to vector<2x32xbf16>
    %148 = arith.extf %147 : vector<2x32xbf16> to vector<2x32xf32>
    %149 = arith.truncf %132 : vector<2x32xf32> to vector<2x32xbf16>
    %cst_71 = arith.constant dense<0.000000e+00> : vector<2x32xf32>
    %150 = tpu.matmul %149, %4, %cst_71 {dimension_numbers = #tpu.dot_dimension_numbers<[1], [0], [0], [1], [0, 0, 1, 1], [], []>} : vector<2x32xbf16>, vector<32x32xbf16>, vector<2x32xf32> -> vector<2x32xf32>
    %cst_72 = arith.constant dense<0.000000e+00> : vector<2x32xf32>
    %151 = tpu.matmul %149, %6, %cst_72 {dimension_numbers = #tpu.dot_dimension_numbers<[1], [0], [0], [1], [0, 0, 1, 1], [], []>} : vector<2x32xbf16>, vector<32x32xbf16>, vector<2x32xf32> -> vector<2x32xf32>
    %cst_73 = arith.constant dense<0.000000e+00> : vector<2x32xf32>
    %152 = tpu.matmul %149, %8, %cst_73 {dimension_numbers = #tpu.dot_dimension_numbers<[1], [0], [0], [1], [0, 0, 1, 1], [], []>} : vector<2x32xbf16>, vector<32x32xbf16>, vector<2x32xf32> -> vector<2x32xf32>
    %153 = arith.addf %140, %150 : vector<2x32xf32>
    %154 = arith.negf %153 : vector<2x32xf32>
    %155 = math.exp %154 : vector<2x32xf32>
    %cst_74 = arith.constant 1.000000e+00 : f32
    %156 = vector.broadcast %cst_74 : f32 to vector<2x32xf32>
    %157 = arith.addf %156, %155 : vector<2x32xf32>
    %158 = arith.divf %156, %157 : vector<2x32xf32>
    %159 = arith.addf %144, %151 : vector<2x32xf32>
    %160 = arith.negf %159 : vector<2x32xf32>
    %161 = math.exp %160 : vector<2x32xf32>
    %cst_75 = arith.constant 1.000000e+00 : f32
    %162 = vector.broadcast %cst_75 : f32 to vector<2x32xf32>
    %163 = arith.addf %162, %161 : vector<2x32xf32>
    %164 = arith.divf %162, %163 : vector<2x32xf32>
    %165 = vector.broadcast %9 : vector<1x32xf32> to vector<2x32xf32>
    %166 = arith.addf %152, %165 : vector<2x32xf32>
    %167 = arith.mulf %158, %166 : vector<2x32xf32>
    %168 = arith.addf %148, %167 : vector<2x32xf32>
    %169 = math.tanh %168 : vector<2x32xf32>
    %cst_76 = arith.constant 1.000000e+00 : f32
    %170 = vector.broadcast %cst_76 : f32 to vector<2x32xf32>
    %171 = arith.subf %170, %164 : vector<2x32xf32>
    %172 = arith.mulf %171, %169 : vector<2x32xf32>
    %173 = arith.mulf %164, %132 : vector<2x32xf32>
    %174 = arith.addf %172, %173 : vector<2x32xf32>
    %175 = arith.index_cast %c3_i32 : i32 to index
    %c0_77 = arith.constant 0 : index
    %c0_78 = arith.constant 0 : index
    %176 = vector.load %arg5[%175, %c0_77, %c0_78] : memref<4x2x32xf32, #tpu.memory_space<vmem>>, vector<1x2x32xf32>
    %177 = vector.shape_cast %176 : vector<1x2x32xf32> to vector<2x32xf32>
    %178 = vector.shape_cast %174 : vector<2x32xf32> to vector<1x2x32xf32>
    tpu.vector_store %arg5[%175, %c0_77, %c0_78], %178 {strides = array<i32>} : memref<4x2x32xf32, #tpu.memory_space<vmem>>, vector<1x2x32xf32>,
    %c4_i32 = arith.constant 4 : i32
    %c0_79 = arith.constant 0 : index
    %c0_80 = arith.constant 0 : index
    %179 = vector.load %arg6[%c0_79, %c0_80] : memref<2x32xf32, #tpu.memory_space<vmem>>, vector<2x32xf32>
    tpu.vector_store %arg6[%c0_79, %c0_80], %174 {strides = array<i32>} : memref<2x32xf32, #tpu.memory_space<vmem>>, vector<2x32xf32>,
    return
  }
  func.func @transform_0(%arg0: i32) -> (i32, i32, i32, i32) {
    %c0_i32 = arith.constant 0 : i32
    %c0_i32_0 = arith.constant 0 : i32
    %c0_i32_1 = arith.constant 0 : i32
    %c0_i32_2 = arith.constant 0 : i32
    return %arg0, %c0_i32, %c0_i32_0, %c0_i32_1 : i32, i32, i32, i32
  }
  func.func @transform_1(%arg0: i32) -> (i32, i32) {
    %c0_i32 = arith.constant 0 : i32
    %c0_i32_0 = arith.constant 0 : i32
    %c0_i32_1 = arith.constant 0 : i32
    return %c0_i32, %c0_i32_0 : i32, i32
  }
  func.func @transform_2(%arg0: i32) -> (i32, i32, i32) {
    %c0_i32 = arith.constant 0 : i32
    %c0_i32_0 = arith.constant 0 : i32
    %c0_i32_1 = arith.constant 0 : i32
    %c0_i32_2 = arith.constant 0 : i32
    return %c0_i32, %c0_i32_0, %c0_i32_1 : i32, i32, i32
  }
  func.func @transform_3(%arg0: i32) -> (i32, i32) {
    %c0_i32 = arith.constant 0 : i32
    %c0_i32_0 = arith.constant 0 : i32
    %c0_i32_1 = arith.constant 0 : i32
    return %c0_i32, %c0_i32_0 : i32, i32
  }
  func.func @transform_4(%arg0: i32) -> (i32, i32, i32) {
    %c0_i32 = arith.constant 0 : i32
    %c0_i32_0 = arith.constant 0 : i32
    %c0_i32_1 = arith.constant 0 : i32
    return %arg0, %c0_i32, %c0_i32_0 : i32, i32, i32
  }
}

</mosaic_0001>

<llo_original>
// kernel: tpu_custom_call.1
$region0: #{tpu_custom_call.1}
  #allocation0 [shape = 'u32[]', space=smem, size = 0x4, offset = 0x4, fixed_abs, tag = 'smem constant byte address 0x4 - core index']
  #allocation1 [shape = 'u32[144,128]{1,0:T(1,128)}', space=vmem, size = 0x12000, scoped, tag = 'internal scratch']
  #allocation2 [shape = 'f32[2,32]{1,0:T(2,128)}', space=vmem, size = 0x400, scoped, tag = 'scratch operand']
  %s0 = inlined_call_operand.hbm [shape: bf16[8,3,2,32], index: 0, kind: input, shape index: {}]
  %s1 = inlined_call_operand.vmem [shape: f32[2,32], index: 1, kind: input, shape index: {}]
  %s2 = inlined_call_operand.hbm [shape: bf16[3,32,32], index: 2, kind: input, shape index: {}]
  %s3 = inlined_call_operand.vmem [shape: f32[1,32], index: 3, kind: input, shape index: {}]
  %s4 = inlined_call_operand.hbm [shape: f32[8,2,32], index: 4, kind: output, shape index: {}]
  %s5 = sld [smem:[#allocation0]]
  $region61: #{tpu_custom_call.1} parent=0
    _
  %s7 = ssub.s32 1, %s5
  %s8 = scalar_select 0, %s7, %s5
  $region1: #{tpu_custom_call.1} parent=0
    #allocation3 [shape = 'u8[12288]{0}', space=vmem, size = 0x3000, scoped, tag = 'input window, operand 0']
    #allocation4 [shape = 's32[2]{0}', space=sflag, size = 0x8, scoped, tag = 'scoped memory for tpu_custom_call.1']
    #allocation5 [shape = 's32[2]{0}', space=sflag, size = 0x8, scoped, tag = 'scoped memory for tpu_custom_call.1']
    #allocation6 [shape = 'u8[24576]{0}', space=vmem, size = 0x6000, scoped, tag = 'input window, operand 2, single buffered']
    #allocation7 [shape = 's32[1]{0}', space=sflag, size = 0x4, scoped, tag = 'scoped memory for tpu_custom_call.1']
    #allocation8 [shape = 'u8[8192]{0}', space=vmem, size = 0x2000, scoped, tag = 'output window, operand 0']
    %9 = vsyncpa [#allocation4], 0
    %s10 = scalar_lea.sflag [#allocation4], 1
    %11 = vsyncpa %s10, 0
    %12 = vsyncpa [#allocation7], 0
    %13 = vsyncpa [#allocation5], 0
    %s14 = scalar_lea.sflag [#allocation5], 1
    %15 = vsyncpa %s14, 0
    loop: start=0, step=1, limit=4
    $region2: #{tpu_custom_call.1} parent=1 // loop_pre_header
      _
    $region3: #{tpu_custom_call.1} parent=1 // loop_header
      %s17 = sphi 0, %s21
      %p18 = scmp.ge.s32.totalorder %s17, 4
      %s27 = sphi 0, %s29
      %s30 = sphi 0, %s27
      %s31 = sphi 0, %s30
      %s47 = sphi 0, %s31
      %s51 = sphi 0, %s51
      %s53 = sphi 0, %s51
      %s54 = sphi 0, %s53
      %s68 = sphi 0, %s54
      %s72 = sphi 0, %s72
      %s74 = sphi 0, %s72
      %s75 = sphi 0, %s74
      %s89 = sphi 0, %s75
      %s93 = sphi 0, %s93
      %s95 = sphi 0, %s93
      %s96 = sphi 0, %s95
      %s110 = sphi 0, %s96
      %s116 = sphi 0, %s118
      %s119 = sphi 0, %s116
      %s120 = sphi 0, %s119
      %s136 = sphi 0, %s120
    $region4: #{tpu_custom_call.1} parent=1 // loop_header_branch
      %20 = sbr.rel (%p18) target = $region8
    $region5: #{tpu_custom_call.1} parent=1 // loop_body
      %s22 = ssub.s32 %s17, 1
      %s23 = ssub.s32 %s17, 2
      %s24 = sadd.s32 %s17, 1
      %s25 = ssub.s32 %s17, %s24
      %p26 = scmp.eq.s32.totalorder %s25, 0
      %s28 = sadd.s32 %s27, 1
      %s29 = scalar_select %p26, %s27, %s28
      %p32 = pneg %p26
      %p33 = scmp.eq.s32.totalorder %s17, 1
      %p34 = por %p32, %p33
      %p35 = scmp.ne.s32.totalorder %s27, %s30
      %p36 = scmp.eq.s32.totalorder %s17, 0
      %p37 = por %p35, %p36
      %p38 = scmp.ne.s32.totalorder %s27, %s30
      %p39 = scmp.eq.s32.totalorder %s22, 1
      %p40 = por %p38, %p39
      %p41 = scmp.ne.s32.totalorder %s30, %s31
      %p42 = scmp.eq.s32.totalorder %s22, 0
      %p43 = por %p41, %p42
      %p44 = scmp.ne.s32.totalorder %s30, %s31
      %p45 = scmp.eq.s32.totalorder %s23, 1
      %p46 = por %p44, %p45
      %p48 = scmp.ne.s32.totalorder %s31, %s47
      %p49 = scmp.eq.s32.totalorder %s23, 0
      %p50 = por %p48, %p49
      %s52 = sadd.s32 %s51, 1
      %p55 = scmp.eq.s32.totalorder %s17, 1
      %p56 = scmp.ne.s32.totalorder %s51, %s53
      %p57 = scmp.eq.s32.totalorder %s17, 0
      %p58 = por %p56, %p57
      %p59 = scmp.ne.s32.totalorder %s51, %s53
      %p60 = scmp.eq.s32.totalorder %s22, 1
      %p61 = por %p59, %p60
      %p62 = scmp.ne.s32.totalorder %s53, %s54
      %p63 = scmp.eq.s32.totalorder %s22, 0
      %p64 = por %p62, %p63
      %p65 = scmp.ne.s32.totalorder %s53, %s54
      %p66 = scmp.eq.s32.totalorder %s23, 1
      %p67 = por %p65, %p66
      %p69 = scmp.ne.s32.totalorder %s54, %s68
      %p70 = scmp.eq.s32.totalorder %s23, 0
      %p71 = por %p69, %p70
      %s73 = sadd.s32 %s72, 1
      %p76 = scmp.eq.s32.totalorder %s17, 1
      %p77 = scmp.ne.s32.totalorder %s72, %s74
      %p78 = scmp.eq.s32.totalorder %s17, 0
      %p79 = por %p77, %p78
      %p80 = scmp.ne.s32.totalorder %s72, %s74
      %p81 = scmp.eq.s32.totalorder %s22, 1
      %p82 = por %p80, %p81
      %p83 = scmp.ne.s32.totalorder %s74, %s75
      %p84 = scmp.eq.s32.totalorder %s22, 0
      %p85 = por %p83, %p84
      %p86 = scmp.ne.s32.totalorder %s74, %s75
      %p87 = scmp.eq.s32.totalorder %s23, 1
      %p88 = por %p86, %p87
      %p90 = scmp.ne.s32.totalorder %s75, %s89
      %p91 = scmp.eq.s32.totalorder %s23, 0
      %p92 = por %p90, %p91
      %s94 = sadd.s32 %s93, 1
      %p97 = scmp.eq.s32.totalorder %s17, 1
      %p98 = scmp.ne.s32.totalorder %s93, %s95
      %p99 = scmp.eq.s32.totalorder %s17, 0
      %p100 = por %p98, %p99
      %p101 = scmp.ne.s32.totalorder %s93, %s95
      %p102 = scmp.eq.s32.totalorder %s22, 1
      %p103 = por %p101, %p102
      %p104 = scmp.ne.s32.totalorder %s95, %s96
      %p105 = scmp.eq.s32.totalorder %s22, 0
      %p106 = por %p104, %p105
      %p107 = scmp.ne.s32.totalorder %s95, %s96
      %p108 = scmp.eq.s32.totalorder %s23, 1
      %p109 = por %p107, %p108
      %p111 = scmp.ne.s32.totalorder %s96, %s110
      %p112 = scmp.eq.s32.totalorder %s23, 0
      %p113 = por %p111, %p112
      %s114 = ssub.s32 %s17, %s24
      %p115 = scmp.eq.s32.totalorder %s114, 0
      %s117 = sadd.s32 %s116, 1
      %s118 = scalar_select %p115, %s116, %s117
      %p121 = pneg %p115
      %p122 = scmp.eq.s32.totalorder %s17, 1
      %p123 = por %p121, %p122
      %p124 = scmp.ne.s32.totalorder %s116, %s119
      %p125 = scmp.eq.s32.totalorder %s17, 0
      %p126 = por %p124, %p125
      %p127 = scmp.ne.s32.totalorder %s116, %s119
      %p128 = scmp.eq.s32.totalorder %s22, 1
      %p129 = por %p127, %p128
      %p130 = scmp.ne.s32.totalorder %s119, %s120
      %p131 = scmp.eq.s32.totalorder %s22, 0
      %p132 = por %p130, %p131
      %p133 = scmp.ne.s32.totalorder %s119, %s120
      %p134 = scmp.eq.s32.totalorder %s23, 1
      %p135 = por %p133, %p134
      %p137 = scmp.ne.s32.totalorder %s120, %s136
      %p138 = scmp.eq.s32.totalorder %s23, 0
      %p139 = por %p137, %p138
      %p140 = scmp.le.s32.totalorder 1, %s17
      %p141 = scmp.lt.s32.totalorder %s17, 3
      %p142 = pnand %p140, %p141
      %p143 = pneg %p142
      // Predicated region
      $region9: #{tpu_custom_call.1} parent=5 // pred_check
        _
      $region10: #{tpu_custom_call.1} parent=5 // pred_check_branch
        %145 = sbr.rel (%p142) target = $region12
      $region11: #{tpu_custom_call.1} parent=5 // pred_region
        %s146 = ssub.s32 %s17, 1
        // Predicated region
        $region13: #{tpu_custom_call.1} parent=11 // pred_check
          %p147 = pneg %p64
        $region14: #{tpu_custom_call.1} parent=11 // pred_check_branch
          %149 = sbr.rel (%p147) target = $region16
        $region15: #{tpu_custom_call.1} parent=11 // pred_region
          _
        $region16: #{tpu_custom_call.1} parent=11 // pred_fallthru
          _
        // Predicated region
        $region17: #{tpu_custom_call.1} parent=11 // pred_check
          %p150 = pneg %p85
        $region18: #{tpu_custom_call.1} parent=11 // pred_check_branch
          %152 = sbr.rel (%p150) target = $region20
        $region19: #{tpu_custom_call.1} parent=11 // pred_region
          %s154 = ssub.s32 768, 768
          %155 = vsyncadd [#allocation7], %s154
          %s156 = sshll.u32 [#allocation6], 4
          %s157 = int_to_ptr.vmem [resolvable:$true] %s156
          %162 = dma.hbm_to_vmem [thread:$0]  %s2, 768, %s157, [#allocation7], 64, 64, 4
        $region20: #{tpu_custom_call.1} parent=11 // pred_fallthru
          _
        // Predicated region
        $region21: #{tpu_custom_call.1} parent=11 // pred_check
          %p163 = pneg %p106
        $region22: #{tpu_custom_call.1} parent=11 // pred_check_branch
          %165 = sbr.rel (%p163) target = $region24
        $region23: #{tpu_custom_call.1} parent=11 // pred_region
          _
        $region24: #{tpu_custom_call.1} parent=11 // pred_fallthru
          _
      $region12: #{tpu_custom_call.1} parent=5 // pred_fallthru
        _
      %p166 = scmp.lt.s32.totalorder %s17, 2
      // Predicated region
      $region25: #{tpu_custom_call.1} parent=5 // pred_check
        %p167 = pneg %p166
      $region26: #{tpu_custom_call.1} parent=5 // pred_check_branch
        %169 = sbr.rel (%p167) target = $region28
      $region27: #{tpu_custom_call.1} parent=5 // pred_region
        // Predicated region
        $region29: #{tpu_custom_call.1} parent=27 // pred_check
          %p170 = pneg %p37
        $region30: #{tpu_custom_call.1} parent=27 // pred_check_branch
          %172 = sbr.rel (%p170) target = $region32
        $region31: #{tpu_custom_call.1} parent=27 // pred_region
          %s173 = sand.u32 %s27, 1
          %s174 = scalar_lea.sflag [#allocation4], %s173
          %s175 = sand.u32 %s27, 1
          %s176 = smul.addr %s175, 12
          %s177 = scalar_lea.vmem [#allocation3], %s176
          %s178 = smul.u32 4, %s17
          %s180 = ssub.s32 192, 192
          %181 = vsyncadd %s174, %s180
          %s182 = smul.addr %s178, 3
          %s183 = smul.addr %s182, 16
          %s184 = scalar_lea.hbm %s0, %s183
          %s185 = sshll.u32 %s177, 4
          %s186 = int_to_ptr.vmem [resolvable:$true] %s185
          %191 = dma.hbm_to_vmem [thread:$0]  %s184, 192, %s186, %s174, 16, 16, 1
        $region32: #{tpu_custom_call.1} parent=27 // pred_fallthru
          _
      $region28: #{tpu_custom_call.1} parent=5 // pred_fallthru
        _
      %p192 = scmp.le.s32.totalorder 1, %s17
      %p193 = scmp.lt.s32.totalorder %s17, 3
      %p194 = pnand %p192, %p193
      %p195 = pneg %p194
      // Predicated region
      $region33: #{tpu_custom_call.1} parent=5 // pred_check
        _
      $region34: #{tpu_custom_call.1} parent=5 // pred_check_branch
        %197 = sbr.rel (%p194) target = $region36
      $region35: #{tpu_custom_call.1} parent=5 // pred_region
        %s198 = ssub.s32 %s17, 1
        %s199 = sand.u32 %s30, 1
        %s200 = scalar_lea.sflag [#allocation4], %s199
        %s201 = sand.u32 %s30, 1
        %s202 = smul.addr %s201, 12
        %s203 = scalar_lea.vmem [#allocation3], %s202
        // Predicated region
        $region37: #{tpu_custom_call.1} parent=35 // pred_check
          %p204 = pneg %p43
        $region38: #{tpu_custom_call.1} parent=35 // pred_check_branch
          %206 = sbr.rel (%p204) target = $region40
        $region39: #{tpu_custom_call.1} parent=35 // pred_region
          %207 = dma.done %s200, 192
        $region40: #{tpu_custom_call.1} parent=35 // pred_fallthru
          _
        // Predicated region
        $region41: #{tpu_custom_call.1} parent=35 // pred_check
          %p208 = pneg %p85
        $region42: #{tpu_custom_call.1} parent=35 // pred_check_branch
          %210 = sbr.rel (%p208) target = $region44
        $region43: #{tpu_custom_call.1} parent=35 // pred_region
          %211 = dma.done [#allocation7], 768
        $region44: #{tpu_custom_call.1} parent=35 // pred_fallthru
          _
        %s212 = sand.u32 %s30, 1
        %s213 = scalar_lea.sflag [#allocation4], %s212
        %s214 = sand.u32 %s30, 1
        %s215 = smul.addr %s214, 12
        %s216 = scalar_lea.vmem [#allocation3], %s215
        %p217 = pneg %p43
        %p218 = pneg %p40
        %p219 = pneg %p64
        %p220 = pneg %p61
        %p221 = pneg %p85
        %p222 = pneg %p82
        %p223 = pneg %p106
        %p224 = pneg %p103
        %p225 = pneg %p132
        %p226 = pneg %p129
        %s227 = sand.u32 %s119, 1
        %s228 = scalar_lea.sflag [#allocation5], %s227
        %s229 = sand.u32 %s119, 1
        %s230 = smul.addr %s229, 8
        %s231 = scalar_lea.vmem [#allocation8], %s230
        %s232 = smul.u32 4, %s22
        %s233 = smul.u32 4, %s22
        %p235 = scmp.eq.s32.totalorder %s22, 0
        // Predicated region
        $region45: #{tpu_custom_call.1} parent=35 // pred_check
          %p236 = pneg %p235
        $region46: #{tpu_custom_call.1} parent=35 // pred_check_branch
          %238 = sbr.rel (%p236) target = $region48
        $region47: #{tpu_custom_call.1} parent=35 // pred_region
          %v239 = vld [vmem:[%s1] sm:$0x3]
          %vm240 = vcmask 254976
          %241 = vst.msk [vmem:[#allocation2] sm:$0x3] %vm240, %v239
        $region48: #{tpu_custom_call.1} parent=35 // pred_fallthru
          _
        %v242 = vld [vmem:[#allocation6] sm:$0xf]
        %v243 = vld [vmem:[#allocation6 + $0x4] sm:$0xf]
        %v244 = vld [vmem:[#allocation6 + $0x8] sm:$0xf]
        %v245 = vld [vmem:[#allocation6 + $0xc] sm:$0xf]
        %s246 = scalar_lea.vmem [#allocation6], 16
        %v247 = vld [vmem:[%s246] sm:$0xf]
        %v248 = vld [vmem:[%s246 + $0x4] sm:$0xf]
        %v249 = vld [vmem:[%s246 + $0x8] sm:$0xf]
        %v250 = vld [vmem:[%s246 + $0xc] sm:$0xf]
        %s251 = scalar_lea.vmem [#allocation6], 32
        %v252 = vld [vmem:[%s251] sm:$0xf]
        %v253 = vld [vmem:[%s251 + $0x4] sm:$0xf]
        %v254 = vld [vmem:[%s251 + $0x8] sm:$0xf]
        %v255 = vld [vmem:[%s251 + $0xc] sm:$0xf]
        %v256 = vld [vmem:[%s3] sm:$0x1]
        %v257 = vld [vmem:[#allocation2] sm:$0x3]
        %v258 = vld [vmem:[%s203] sm:$0x1]
        %v259 = vunpack.c.l.bf16 %v258
        %s260 = scalar_lea.vmem %s203, 1 [#allocation3]
        %v261 = vld [vmem:[%s260] sm:$0x1]
        %v262 = vunpack.c.l.bf16 %v261
        %s263 = scalar_lea.vmem %s203, 2 [#allocation3]
        %v264 = vld [vmem:[%s263] sm:$0x1]
        %v265 = vunpack.c.l.bf16 %v264
        %v266 = vpack.c.bf16 %v257, %v257
        %v271 = vunpack.c.l.b16 %v242
        %v272 = vunpack.c.l.b16 %v243
        %v273 = vunpack.c.l.b16 %v244
        %v274 = vunpack.c.l.b16 %v245
        %v275 = vpack.c.b16 %v272, %v271
        %v276 = vpack.c.b16 %v274, %v273
        %vm279 = vcmask 261120
        %v281 = vsel %vm279, %v266, 0
        %283 = vmatprep.subr.bf16.mxu0 0
        %284 = vmatpush1.bf16.msra.mxu0 %v275
        %285 = vmatprep.subr.bf16.mxu0 0
        %286 = vmatpush1.bf16.msra.mxu0 %v276
        %287 = vmatprep.subr.bf16.mxu0 0
        %288 = vmatpush1.bf16.msra.mxu0 0
        %289 = vmatprep.subr.bf16.mxu0 0
        %290 = vmatpush1.bf16.msra.mxu0 0
        %291 = vmatprep.subr.bf16.mxu0 0
        %292 = vmatpush1.bf16.msra.mxu0 0
        %293 = vmatprep.subr.bf16.mxu0 0
        %294 = vmatpush1.bf16.msra.mxu0 0
        %295 = vmatprep.subr.bf16.mxu0 0
        %296 = vmatpush1.bf16.msra.mxu0 0
        %297 = vmatprep.subr.bf16.mxu0 0
        %298 = vmatpush1.bf16.msra.mxu0 0
        %299 = vmatprep.subr.bf16.mxu0 0
        %300 = vmatpush1.bf16.msra.mxu0 0
        %301 = vmatprep.subr.bf16.mxu0 0
        %302 = vmatpush1.bf16.msra.mxu0 0
        %303 = vmatprep.subr.bf16.mxu0 0
        %304 = vmatpush1.bf16.msra.mxu0 0
        %305 = vmatprep.subr.bf16.mxu0 0
        %306 = vmatpush1.bf16.msra.mxu0 0
        %307 = vmatprep.subr.bf16.mxu0 0
        %308 = vmatpush1.bf16.msra.mxu0 0
        %309 = vmatprep.subr.bf16.mxu0 0
        %310 = vmatpush1.bf16.msra.mxu0 0
        %311 = vmatprep.subr.bf16.mxu0 0
        %312 = vmatpush1.bf16.msra.mxu0 0
        %313 = vmatprep.subr.bf16.mxu0 0
        %314 = vmatpush1.bf16.msra.mxu0 0
        %315 = vmatprep.mubr.bf16.mxu0 0
        %316 = vmatmul.mubr.bf16.gmra.mrb[0].mxu0 %v281
        %v317 = vpop.f32.mrb[0].mxu0
        %v318 = vadd.f32 0.0, %v317
        %v319 = vpop.f32.mrb[0].mxu0
        %v320 = vpop.f32.mrb[0].mxu0
        %v321 = vpop.f32.mrb[0].mxu0
        %322 = vdwg.mxu0
        %v327 = vunpack.c.l.b16 %v247
        %v328 = vunpack.c.l.b16 %v248
        %v329 = vunpack.c.l.b16 %v249
        %v330 = vunpack.c.l.b16 %v250
        %v331 = vpack.c.b16 %v328, %v327
        %v332 = vpack.c.b16 %v330, %v329
        %335 = vmatprep.subr.bf16.mxu0 0
        %336 = vmatpush1.bf16.msra.mxu0 %v331
        %337 = vmatprep.subr.bf16.mxu0 0
        %338 = vmatpush1.bf16.msra.mxu0 %v332
        %339 = vmatprep.subr.bf16.mxu0 0
        %340 = vmatpush1.bf16.msra.mxu0 0
        %341 = vmatprep.subr.bf16.mxu0 0
        %342 = vmatpush1.bf16.msra.mxu0 0
        %343 = vmatprep.subr.bf16.mxu0 0
        %344 = vmatpush1.bf16.msra.mxu0 0
        %345 = vmatprep.subr.bf16.mxu0 0
        %346 = vmatpush1.bf16.msra.mxu0 0
        %347 = vmatprep.subr.bf16.mxu0 0
        %348 = vmatpush1.bf16.msra.mxu0 0
        %349 = vmatprep.subr.bf16.mxu0 0
        %350 = vmatpush1.bf16.msra.mxu0 0
        %351 = vmatprep.subr.bf16.mxu0 0
        %352 = vmatpush1.bf16.msra.mxu0 0
        %353 = vmatprep.subr.bf16.mxu0 0
        %354 = vmatpush1.bf16.msra.mxu0 0
        %355 = vmatprep.subr.bf16.mxu0 0
        %356 = vmatpush1.bf16.msra.mxu0 0
        %357 = vmatprep.subr.bf16.mxu0 0
        %358 = vmatpush1.bf16.msra.mxu0 0
        %359 = vmatprep.subr.bf16.mxu0 0
        %360 = vmatpush1.bf16.msra.mxu0 0
        %361 = vmatprep.subr.bf16.mxu0 0
        %362 = vmatpush1.bf16.msra.mxu0 0
        %363 = vmatprep.subr.bf16.mxu0 0
        %364 = vmatpush1.bf16.msra.mxu0 0
        %365 = vmatprep.subr.bf16.mxu0 0
        %366 = vmatpush1.bf16.msra.mxu0 0
        %367 = vmatprep.mubr.bf16.mxu0 0
        %368 = vmatmul.mubr.bf16.gmra.mrb[0].mxu0 %v281
        %v369 = vpop.f32.mrb[0].mxu0
        %v370 = vadd.f32 0.0, %v369
        %v371 = vpop.f32.mrb[0].mxu0
        %v372 = vpop.f32.mrb[0].mxu0
        %v373 = vpop.f32.mrb[0].mxu0
        %374 = vdwg.mxu0
        %v375 = vadd.f32 %v259, %v318
        %v376 = vxor.u32 %v375, 2147483648
        %v377 = vmul.f32 %v376, 1.442695
        %v378 = vpow.pop %v377
        %v379 = vadd.f32 %v378, 1.0
        %v380 = vrcp.pop %v379
        %v381 = vmul.f32 1.0, %v380
        %v382 = vadd.f32 %v262, %v370
        %v383 = vxor.u32 %v382, 2147483648
        %v384 = vmul.f32 %v383, 1.442695
        %v385 = vpow.pop %v384
        %v386 = vadd.f32 %v385, 1.0
        %v387 = vrcp.pop %v386
        %v388 = vmul.f32 1.0, %v387
        %v390 = vlaneseq
        %v391 = vshrl.u32 %v390, 7
        %v392 = vsub.s32 0, %v391
        %v393 = vrot.slane %v256, %v392
        %v399 = vunpack.c.l.b16 %v252
        %v400 = vunpack.c.l.b16 %v253
        %v401 = vunpack.c.l.b16 %v254
        %v402 = vunpack.c.l.b16 %v255
        %v403 = vpack.c.b16 %v400, %v399
        %v404 = vpack.c.b16 %v402, %v401
        %407 = vmatprep.subr.bf16.mxu0 0
        %408 = vmatpush1.bf16.msra.mxu0 %v403
        %409 = vmatprep.subr.bf16.mxu0 0
        %410 = vmatpush1.bf16.msra.mxu0 %v404
        %411 = vmatprep.subr.bf16.mxu0 0
        %412 = vmatpush1.bf16.msra.mxu0 0
        %413 = vmatprep.subr.bf16.mxu0 0
        %414 = vmatpush1.bf16.msra.mxu0 0
        %415 = vmatprep.subr.bf16.mxu0 0
        %416 = vmatpush1.bf16.msra.mxu0 0
        %417 = vmatprep.subr.bf16.mxu0 0
        %418 = vmatpush1.bf16.msra.mxu0 0
        %419 = vmatprep.subr.bf16.mxu0 0
        %420 = vmatpush1.bf16.msra.mxu0 0
        %421 = vmatprep.subr.bf16.mxu0 0
        %422 = vmatpush1.bf16.msra.mxu0 0
        %423 = vmatprep.subr.bf16.mxu0 0
        %424 = vmatpush1.bf16.msra.mxu0 0
        %425 = vmatprep.subr.bf16.mxu0 0
        %426 = vmatpush1.bf16.msra.mxu0 0
        %427 = vmatprep.subr.bf16.mxu0 0
        %428 = vmatpush1.bf16.msra.mxu0 0
        %429 = vmatprep.subr.bf16.mxu0 0
        %430 = vmatpush1.bf16.msra.mxu0 0
        %431 = vmatprep.subr.bf16.mxu0 0
        %432 = vmatpush1.bf16.msra.mxu0 0
        %433 = vmatprep.subr.bf16.mxu0 0
        %434 = vmatpush1.bf16.msra.mxu0 0
        %435 = vmatprep.subr.bf16.mxu0 0
        %436 = vmatpush1.bf16.msra.mxu0 0
        %437 = vmatprep.subr.bf16.mxu0 0
        %438 = vmatpush1.bf16.msra.mxu0 0
        %439 = vmatprep.mubr.bf16.mxu0 0
        %440 = vmatmul.mubr.bf16.gmra.mrb[0].mxu0 %v281
        %v441 = vpop.f32.mrb[0].mxu0
        %v442 = vadd.f32 %v393, %v441
        %v443 = vpop.f32.mrb[0].mxu0
        %v444 = vpop.f32.mrb[0].mxu0
        %v445 = vpop.f32.mrb[0].mxu0
        %446 = vdwg.mxu0
        %v447 = vmul.f32 %v381, %v442
        %v448 = vadd.f32 %v265, %v447
        %v449 = vtanh.pop %v448
        %v450 = vsub.f32 1.0, %v388
        %v451 = vmul.f32 %v450, %v449
        %v452 = vmul.f32 %v388, %v257
        %v453 = vadd.f32 %v451, %v452
        %vm454 = vcmask 254976
        %455 = vst.msk [vmem:[%s231] sm:$0x3] %vm454, %v453
        %s456 = scalar_lea.vmem %s203, 3 [#allocation3]
        %v457 = vld [vmem:[%s456] sm:$0x1]
        %v458 = vunpack.c.l.bf16 %v457
        %s459 = scalar_lea.vmem %s203, 4 [#allocation3]
        %v460 = vld [vmem:[%s459] sm:$0x1]
        %v461 = vunpack.c.l.bf16 %v460
        %s462 = scalar_lea.vmem %s203, 5 [#allocation3]
        %v463 = vld [vmem:[%s462] sm:$0x1]
        %v464 = vunpack.c.l.bf16 %v463
        %v465 = vpack.c.bf16 %v453, %v453
        %v467 = vsel %vm279, %v465, 0
        %469 = vmatprep.subr.bf16.mxu0 0
        %470 = vmatpush1.bf16.msra.mxu0 %v275
        %471 = vmatprep.subr.bf16.mxu0 0
        %472 = vmatpush1.bf16.msra.mxu0 %v276
        %473 = vmatprep.subr.bf16.mxu0 0
        %474 = vmatpush1.bf16.msra.mxu0 0
        %475 = vmatprep.subr.bf16.mxu0 0
        %476 = vmatpush1.bf16.msra.mxu0 0
        %477 = vmatprep.subr.bf16.mxu0 0
        %478 = vmatpush1.bf16.msra.mxu0 0
        %479 = vmatprep.subr.bf16.mxu0 0
        %480 = vmatpush1.bf16.msra.mxu0 0
        %481 = vmatprep.subr.bf16.mxu0 0
        %482 = vmatpush1.bf16.msra.mxu0 0
        %483 = vmatprep.subr.bf16.mxu0 0
        %484 = vmatpush1.bf16.msra.mxu0 0
        %485 = vmatprep.subr.bf16.mxu0 0
        %486 = vmatpush1.bf16.msra.mxu0 0
        %487 = vmatprep.subr.bf16.mxu0 0
        %488 = vmatpush1.bf16.msra.mxu0 0
        %489 = vmatprep.subr.bf16.mxu0 0
        %490 = vmatpush1.bf16.msra.mxu0 0
        %491 = vmatprep.subr.bf16.mxu0 0
        %492 = vmatpush1.bf16.msra.mxu0 0
        %493 = vmatprep.subr.bf16.mxu0 0
        %494 = vmatpush1.bf16.msra.mxu0 0
        %495 = vmatprep.subr.bf16.mxu0 0
        %496 = vmatpush1.bf16.msra.mxu0 0
        %497 = vmatprep.subr.bf16.mxu0 0
        %498 = vmatpush1.bf16.msra.mxu0 0
        %499 = vmatprep.subr.bf16.mxu0 0
        %500 = vmatpush1.bf16.msra.mxu0 0
        %501 = vmatprep.mubr.bf16.mxu0 0
        %502 = vmatmul.mubr.bf16.gmra.mrb[0].mxu0 %v467
        %v503 = vpop.f32.mrb[0].mxu0
        %v504 = vadd.f32 0.0, %v503
        %v505 = vpop.f32.mrb[0].mxu0
        %v506 = vpop.f32.mrb[0].mxu0
        %v507 = vpop.f32.mrb[0].mxu0
        %508 = vdwg.mxu0
        %509 = vmatprep.subr.bf16.mxu0 0
        %510 = vmatpush1.bf16.msra.mxu0 %v331
        %511 = vmatprep.subr.bf16.mxu0 0
        %512 = vmatpush1.bf16.msra.mxu0 %v332
        %513 = vmatprep.subr.bf16.mxu0 0
        %514 = vmatpush1.bf16.msra.mxu0 0
        %515 = vmatprep.subr.bf16.mxu0 0
        %516 = vmatpush1.bf16.msra.mxu0 0
        %517 = vmatprep.subr.bf16.mxu0 0
        %518 = vmatpush1.bf16.msra.mxu0 0
        %519 = vmatprep.subr.bf16.mxu0 0
        %520 = vmatpush1.bf16.msra.mxu0 0
        %521 = vmatprep.subr.bf16.mxu0 0
        %522 = vmatpush1.bf16.msra.mxu0 0
        %523 = vmatprep.subr.bf16.mxu0 0
        %524 = vmatpush1.bf16.msra.mxu0 0
        %525 = vmatprep.subr.bf16.mxu0 0
        %526 = vmatpush1.bf16.msra.mxu0 0
        %527 = vmatprep.subr.bf16.mxu0 0
        %528 = vmatpush1.bf16.msra.mxu0 0
        %529 = vmatprep.subr.bf16.mxu0 0
        %530 = vmatpush1.bf16.msra.mxu0 0
        %531 = vmatprep.subr.bf16.mxu0 0
        %532 = vmatpush1.bf16.msra.mxu0 0
        %533 = vmatprep.subr.bf16.mxu0 0
        %534 = vmatpush1.bf16.msra.mxu0 0
        %535 = vmatprep.subr.bf16.mxu0 0
        %536 = vmatpush1.bf16.msra.mxu0 0
        %537 = vmatprep.subr.bf16.mxu0 0
        %538 = vmatpush1.bf16.msra.mxu0 0
        %539 = vmatprep.subr.bf16.mxu0 0
        %540 = vmatpush1.bf16.msra.mxu0 0
        %541 = vmatprep.mubr.bf16.mxu0 0
        %542 = vmatmul.mubr.bf16.gmra.mrb[0].mxu0 %v467
        %v543 = vpop.f32.mrb[0].mxu0
        %v544 = vadd.f32 0.0, %v543
        %v545 = vpop.f32.mrb[0].mxu0
        %v546 = vpop.f32.mrb[0].mxu0
        %v547 = vpop.f32.mrb[0].mxu0
        %548 = vdwg.mxu0
        %v549 = vadd.f32 %v458, %v504
        %v550 = vxor.u32 %v549, 2147483648
        %v551 = vmul.f32 %v550, 1.442695
        %v552 = vpow.pop %v551
        %v553 = vadd.f32 %v552, 1.0
        %v554 = vrcp.pop %v553
        %v555 = vmul.f32 1.0, %v554
        %v556 = vadd.f32 %v461, %v544
        %v557 = vxor.u32 %v556, 2147483648
        %v558 = vmul.f32 %v557, 1.442695
        %v559 = vpow.pop %v558
        %v560 = vadd.f32 %v559, 1.0
        %v561 = vrcp.pop %v560
        %v562 = vmul.f32 1.0, %v561
        %563 = vmatprep.subr.bf16.mxu0 0
        %564 = vmatpush1.bf16.msra.mxu0 %v403
        %565 = vmatprep.subr.bf16.mxu0 0
        %566 = vmatpush1.bf16.msra.mxu0 %v404
        %567 = vmatprep.subr.bf16.mxu0 0
        %568 = vmatpush1.bf16.msra.mxu0 0
        %569 = vmatprep.subr.bf16.mxu0 0
        %570 = vmatpush1.bf16.msra.mxu0 0
        %571 = vmatprep.subr.bf16.mxu0 0
        %572 = vmatpush1.bf16.msra.mxu0 0
        %573 = vmatprep.subr.bf16.mxu0 0
        %574 = vmatpush1.bf16.msra.mxu0 0
        %575 = vmatprep.subr.bf16.mxu0 0
        %576 = vmatpush1.bf16.msra.mxu0 0
        %577 = vmatprep.subr.bf16.mxu0 0
        %578 = vmatpush1.bf16.msra.mxu0 0
        %579 = vmatprep.subr.bf16.mxu0 0
        %580 = vmatpush1.bf16.msra.mxu0 0
        %581 = vmatprep.subr.bf16.mxu0 0
        %582 = vmatpush1.bf16.msra.mxu0 0
        %583 = vmatprep.subr.bf16.mxu0 0
        %584 = vmatpush1.bf16.msra.mxu0 0
        %585 = vmatprep.subr.bf16.mxu0 0
        %586 = vmatpush1.bf16.msra.mxu0 0
        %587 = vmatprep.subr.bf16.mxu0 0
        %588 = vmatpush1.bf16.msra.mxu0 0
        %589 = vmatprep.subr.bf16.mxu0 0
        %590 = vmatpush1.bf16.msra.mxu0 0
        %591 = vmatprep.subr.bf16.mxu0 0
        %592 = vmatpush1.bf16.msra.mxu0 0
        %593 = vmatprep.subr.bf16.mxu0 0
        %594 = vmatpush1.bf16.msra.mxu0 0
        %595 = vmatprep.mubr.bf16.mxu0 0
        %596 = vmatmul.mubr.bf16.gmra.mrb[0].mxu0 %v467
        %v597 = vpop.f32.mrb[0].mxu0
        %v598 = vadd.f32 %v393, %v597
        %v599 = vpop.f32.mrb[0].mxu0
        %v600 = vpop.f32.mrb[0].mxu0
        %v601 = vpop.f32.mrb[0].mxu0
        %602 = vdwg.mxu0
        %v603 = vmul.f32 %v555, %v598
        %v604 = vadd.f32 %v464, %v603
        %v605 = vtanh.pop %v604
        %v606 = vsub.f32 1.0, %v562
        %v607 = vmul.f32 %v606, %v605
        %v608 = vmul.f32 %v562, %v453
        %v609 = vadd.f32 %v607, %v608
        %s610 = scalar_lea.vmem %s231, 2 [#allocation8]
        %611 = vst.msk [vmem:[%s610] sm:$0x3] %vm454, %v609
        %s612 = scalar_lea.vmem %s203, 6 [#allocation3]
        %v613 = vld [vmem:[%s612] sm:$0x1]
        %v614 = vunpack.c.l.bf16 %v613
        %s615 = scalar_lea.vmem %s203, 7 [#allocation3]
        %v616 = vld [vmem:[%s615] sm:$0x1]
        %v617 = vunpack.c.l.bf16 %v616
        %s618 = scalar_lea.vmem %s203, 8 [#allocation3]
        %v619 = vld [vmem:[%s618] sm:$0x1]
        %v620 = vunpack.c.l.bf16 %v619
        %v621 = vpack.c.bf16 %v609, %v609
        %v623 = vsel %vm279, %v621, 0
        %625 = vmatprep.subr.bf16.mxu0 0
        %626 = vmatpush1.bf16.msra.mxu0 %v275
        %627 = vmatprep.subr.bf16.mxu0 0
        %628 = vmatpush1.bf16.msra.mxu0 %v276
        %629 = vmatprep.subr.bf16.mxu0 0
        %630 = vmatpush1.bf16.msra.mxu0 0
        %631 = vmatprep.subr.bf16.mxu0 0
        %632 = vmatpush1.bf16.msra.mxu0 0
        %633 = vmatprep.subr.bf16.mxu0 0
        %634 = vmatpush1.bf16.msra.mxu0 0
        %635 = vmatprep.subr.bf16.mxu0 0
        %636 = vmatpush1.bf16.msra.mxu0 0
        %637 = vmatprep.subr.bf16.mxu0 0
        %638 = vmatpush1.bf16.msra.mxu0 0
        %639 = vmatprep.subr.bf16.mxu0 0
        %640 = vmatpush1.bf16.msra.mxu0 0
        %641 = vmatprep.subr.bf16.mxu0 0
        %642 = vmatpush1.bf16.msra.mxu0 0
        %643 = vmatprep.subr.bf16.mxu0 0
        %644 = vmatpush1.bf16.msra.mxu0 0
        %645 = vmatprep.subr.bf16.mxu0 0
        %646 = vmatpush1.bf16.msra.mxu0 0
        %647 = vmatprep.subr.bf16.mxu0 0
        %648 = vmatpush1.bf16.msra.mxu0 0
        %649 = vmatprep.subr.bf16.mxu0 0
        %650 = vmatpush1.bf16.msra.mxu0 0
        %651 = vmatprep.subr.bf16.mxu0 0
        %652 = vmatpush1.bf16.msra.mxu0 0
        %653 = vmatprep.subr.bf16.mxu0 0
        %654 = vmatpush1.bf16.msra.mxu0 0
        %655 = vmatprep.subr.bf16.mxu0 0
        %656 = vmatpush1.bf16.msra.mxu0 0
        %657 = vmatprep.mubr.bf16.mxu0 0
        %658 = vmatmul.mubr.bf16.gmra.mrb[0].mxu0 %v623
        %v659 = vpop.f32.mrb[0].mxu0
        %v660 = vadd.f32 0.0, %v659
        %v661 = vpop.f32.mrb[0].mxu0
        %v662 = vpop.f32.mrb[0].mxu0
        %v663 = vpop.f32.mrb[0].mxu0
        %664 = vdwg.mxu0
        %665 = vmatprep.subr.bf16.mxu0 0
        %666 = vmatpush1.bf16.msra.mxu0 %v331
        %667 = vmatprep.subr.bf16.mxu0 0
        %668 = vmatpush1.bf16.msra.mxu0 %v332
        %669 = vmatprep.subr.bf16.mxu0 0
        %670 = vmatpush1.bf16.msra.mxu0 0
        %671 = vmatprep.subr.bf16.mxu0 0
        %672 = vmatpush1.bf16.msra.mxu0 0
        %673 = vmatprep.subr.bf16.mxu0 0
        %674 = vmatpush1.bf16.msra.mxu0 0
        %675 = vmatprep.subr.bf16.mxu0 0
        %676 = vmatpush1.bf16.msra.mxu0 0
        %677 = vmatprep.subr.bf16.mxu0 0
        %678 = vmatpush1.bf16.msra.mxu0 0
        %679 = vmatprep.subr.bf16.mxu0 0
        %680 = vmatpush1.bf16.msra.mxu0 0
        %681 = vmatprep.subr.bf16.mxu0 0
        %682 = vmatpush1.bf16.msra.mxu0 0
        %683 = vmatprep.subr.bf16.mxu0 0
        %684 = vmatpush1.bf16.msra.mxu0 0
        %685 = vmatprep.subr.bf16.mxu0 0
        %686 = vmatpush1.bf16.msra.mxu0 0
        %687 = vmatprep.subr.bf16.mxu0 0
        %688 = vmatpush1.bf16.msra.mxu0 0
        %689 = vmatprep.subr.bf16.mxu0 0
        %690 = vmatpush1.bf16.msra.mxu0 0
        %691 = vmatprep.subr.bf16.mxu0 0
        %692 = vmatpush1.bf16.msra.mxu0 0
        %693 = vmatprep.subr.bf16.mxu0 0
        %694 = vmatpush1.bf16.msra.mxu0 0
        %695 = vmatprep.subr.bf16.mxu0 0
        %696 = vmatpush1.bf16.msra.mxu0 0
        %697 = vmatprep.mubr.bf16.mxu0 0
        %698 = vmatmul.mubr.bf16.gmra.mrb[0].mxu0 %v623
        %v699 = vpop.f32.mrb[0].mxu0
        %v700 = vadd.f32 0.0, %v699
        %v701 = vpop.f32.mrb[0].mxu0
        %v702 = vpop.f32.mrb[0].mxu0
        %v703 = vpop.f32.mrb[0].mxu0
        %704 = vdwg.mxu0
        %v705 = vadd.f32 %v614, %v660
        %v706 = vxor.u32 %v705, 2147483648
        %v707 = vmul.f32 %v706, 1.442695
        %v708 = vpow.pop %v707
        %v709 = vadd.f32 %v708, 1.0
        %v710 = vrcp.pop %v709
        %v711 = vmul.f32 1.0, %v710
        %v712 = vadd.f32 %v617, %v700
        %v713 = vxor.u32 %v712, 2147483648
        %v714 = vmul.f32 %v713, 1.442695
        %v715 = vpow.pop %v714
        %v716 = vadd.f32 %v715, 1.0
        %v717 = vrcp.pop %v716
        %v718 = vmul.f32 1.0, %v717
        %719 = vmatprep.subr.bf16.mxu0 0
        %720 = vmatpush1.bf16.msra.mxu0 %v403
        %721 = vmatprep.subr.bf16.mxu0 0
        %722 = vmatpush1.bf16.msra.mxu0 %v404
        %723 = vmatprep.subr.bf16.mxu0 0
        %724 = vmatpush1.bf16.msra.mxu0 0
        %725 = vmatprep.subr.bf16.mxu0 0
        %726 = vmatpush1.bf16.msra.mxu0 0
        %727 = vmatprep.subr.bf16.mxu0 0
        %728 = vmatpush1.bf16.msra.mxu0 0
        %729 = vmatprep.subr.bf16.mxu0 0
        %730 = vmatpush1.bf16.msra.mxu0 0
        %731 = vmatprep.subr.bf16.mxu0 0
        %732 = vmatpush1.bf16.msra.mxu0 0
        %733 = vmatprep.subr.bf16.mxu0 0
        %734 = vmatpush1.bf16.msra.mxu0 0
        %735 = vmatprep.subr.bf16.mxu0 0
        %736 = vmatpush1.bf16.msra.mxu0 0
        %737 = vmatprep.subr.bf16.mxu0 0
        %738 = vmatpush1.bf16.msra.mxu0 0
        %739 = vmatprep.subr.bf16.mxu0 0
        %740 = vmatpush1.bf16.msra.mxu0 0
        %741 = vmatprep.subr.bf16.mxu0 0
        %742 = vmatpush1.bf16.msra.mxu0 0
        %743 = vmatprep.subr.bf16.mxu0 0
        %744 = vmatpush1.bf16.msra.mxu0 0
        %745 = vmatprep.subr.bf16.mxu0 0
        %746 = vmatpush1.bf16.msra.mxu0 0
        %747 = vmatprep.subr.bf16.mxu0 0
        %748 = vmatpush1.bf16.msra.mxu0 0
        %749 = vmatprep.subr.bf16.mxu0 0
        %750 = vmatpush1.bf16.msra.mxu0 0
        %751 = vmatprep.mubr.bf16.mxu0 0
        %752 = vmatmul.mubr.bf16.gmra.mrb[0].mxu0 %v623
        %v753 = vpop.f32.mrb[0].mxu0
        %v754 = vadd.f32 %v393, %v753
        %v755 = vpop.f32.mrb[0].mxu0
        %v756 = vpop.f32.mrb[0].mxu0
        %v757 = vpop.f32.mrb[0].mxu0
        %758 = vdwg.mxu0
        %v759 = vmul.f32 %v711, %v754
        %v760 = vadd.f32 %v620, %v759
        %v761 = vtanh.pop %v760
        %v762 = vsub.f32 1.0, %v718
        %v763 = vmul.f32 %v762, %v761
        %v764 = vmul.f32 %v718, %v609
        %v765 = vadd.f32 %v763, %v764
        %s766 = scalar_lea.vmem %s231, 4 [#allocation8]
        %767 = vst.msk [vmem:[%s766] sm:$0x3] %vm454, %v765
        %s768 = scalar_lea.vmem %s203, 9 [#allocation3]
        %v769 = vld [vmem:[%s768] sm:$0x1]
        %v770 = vunpack.c.l.bf16 %v769
        %s771 = scalar_lea.vmem %s203, 10 [#allocation3]
        %v772 = vld [vmem:[%s771] sm:$0x1]
        %v773 = vunpack.c.l.bf16 %v772
        %s774 = scalar_lea.vmem %s203, 11 [#allocation3]
        %v775 = vld [vmem:[%s774] sm:$0x1]
        %v776 = vunpack.c.l.bf16 %v775
        %v777 = vpack.c.bf16 %v765, %v765
        %v779 = vsel %vm279, %v777, 0
        %781 = vmatprep.subr.bf16.mxu0 0
        %782 = vmatpush1.bf16.msra.mxu0 %v275
        %783 = vmatprep.subr.bf16.mxu0 0
        %784 = vmatpush1.bf16.msra.mxu0 %v276
        %785 = vmatprep.subr.bf16.mxu0 0
        %786 = vmatpush1.bf16.msra.mxu0 0
        %787 = vmatprep.subr.bf16.mxu0 0
        %788 = vmatpush1.bf16.msra.mxu0 0
        %789 = vmatprep.subr.bf16.mxu0 0
        %790 = vmatpush1.bf16.msra.mxu0 0
        %791 = vmatprep.subr.bf16.mxu0 0
        %792 = vmatpush1.bf16.msra.mxu0 0
        %793 = vmatprep.subr.bf16.mxu0 0
        %794 = vmatpush1.bf16.msra.mxu0 0
        %795 = vmatprep.subr.bf16.mxu0 0
        %796 = vmatpush1.bf16.msra.mxu0 0
        %797 = vmatprep.subr.bf16.mxu0 0
        %798 = vmatpush1.bf16.msra.mxu0 0
        %799 = vmatprep.subr.bf16.mxu0 0
        %800 = vmatpush1.bf16.msra.mxu0 0
        %801 = vmatprep.subr.bf16.mxu0 0
        %802 = vmatpush1.bf16.msra.mxu0 0
        %803 = vmatprep.subr.bf16.mxu0 0
        %804 = vmatpush1.bf16.msra.mxu0 0
        %805 = vmatprep.subr.bf16.mxu0 0
        %806 = vmatpush1.bf16.msra.mxu0 0
        %807 = vmatprep.subr.bf16.mxu0 0
        %808 = vmatpush1.bf16.msra.mxu0 0
        %809 = vmatprep.subr.bf16.mxu0 0
        %810 = vmatpush1.bf16.msra.mxu0 0
        %811 = vmatprep.subr.bf16.mxu0 0
        %812 = vmatpush1.bf16.msra.mxu0 0
        %813 = vmatprep.mubr.bf16.mxu0 0
        %814 = vmatmul.mubr.bf16.gmra.mrb[0].mxu0 %v779
        %v815 = vpop.f32.mrb[0].mxu0
        %v816 = vadd.f32 0.0, %v815
        %v817 = vpop.f32.mrb[0].mxu0
        %v818 = vpop.f32.mrb[0].mxu0
        %v819 = vpop.f32.mrb[0].mxu0
        %820 = vdwg.mxu0
        %821 = vmatprep.subr.bf16.mxu0 0
        %822 = vmatpush1.bf16.msra.mxu0 %v331
        %823 = vmatprep.subr.bf16.mxu0 0
        %824 = vmatpush1.bf16.msra.mxu0 %v332
        %825 = vmatprep.subr.bf16.mxu0 0
        %826 = vmatpush1.bf16.msra.mxu0 0
        %827 = vmatprep.subr.bf16.mxu0 0
        %828 = vmatpush1.bf16.msra.mxu0 0
        %829 = vmatprep.subr.bf16.mxu0 0
        %830 = vmatpush1.bf16.msra.mxu0 0
        %831 = vmatprep.subr.bf16.mxu0 0
        %832 = vmatpush1.bf16.msra.mxu0 0
        %833 = vmatprep.subr.bf16.mxu0 0
        %834 = vmatpush1.bf16.msra.mxu0 0
        %835 = vmatprep.subr.bf16.mxu0 0
        %836 = vmatpush1.bf16.msra.mxu0 0
        %837 = vmatprep.subr.bf16.mxu0 0
        %838 = vmatpush1.bf16.msra.mxu0 0
        %839 = vmatprep.subr.bf16.mxu0 0
        %840 = vmatpush1.bf16.msra.mxu0 0
        %841 = vmatprep.subr.bf16.mxu0 0
        %842 = vmatpush1.bf16.msra.mxu0 0
        %843 = vmatprep.subr.bf16.mxu0 0
        %844 = vmatpush1.bf16.msra.mxu0 0
        %845 = vmatprep.subr.bf16.mxu0 0
        %846 = vmatpush1.bf16.msra.mxu0 0
        %847 = vmatprep.subr.bf16.mxu0 0
        %848 = vmatpush1.bf16.msra.mxu0 0
        %849 = vmatprep.subr.bf16.mxu0 0
        %850 = vmatpush1.bf16.msra.mxu0 0
        %851 = vmatprep.subr.bf16.mxu0 0
        %852 = vmatpush1.bf16.msra.mxu0 0
        %853 = vmatprep.mubr.bf16.mxu0 0
        %854 = vmatmul.mubr.bf16.gmra.mrb[0].mxu0 %v779
        %v855 = vpop.f32.mrb[0].mxu0
        %v856 = vadd.f32 0.0, %v855
        %v857 = vpop.f32.mrb[0].mxu0
        %v858 = vpop.f32.mrb[0].mxu0
        %v859 = vpop.f32.mrb[0].mxu0
        %860 = vdwg.mxu0
        %v861 = vadd.f32 %v770, %v816
        %v862 = vxor.u32 %v861, 2147483648
        %v863 = vmul.f32 %v862, 1.442695
        %v864 = vpow.pop %v863
        %v865 = vadd.f32 %v864, 1.0
        %v866 = vrcp.pop %v865
        %v867 = vmul.f32 1.0, %v866
        %v868 = vadd.f32 %v773, %v856
        %v869 = vxor.u32 %v868, 2147483648
        %v870 = vmul.f32 %v869, 1.442695
        %v871 = vpow.pop %v870
        %v872 = vadd.f32 %v871, 1.0
        %v873 = vrcp.pop %v872
        %v874 = vmul.f32 1.0, %v873
        %875 = vmatprep.subr.bf16.mxu0 0
        %876 = vmatpush1.bf16.msra.mxu0 %v403
        %877 = vmatprep.subr.bf16.mxu0 0
        %878 = vmatpush1.bf16.msra.mxu0 %v404
        %879 = vmatprep.subr.bf16.mxu0 0
        %880 = vmatpush1.bf16.msra.mxu0 0
        %881 = vmatprep.subr.bf16.mxu0 0
        %882 = vmatpush1.bf16.msra.mxu0 0
        %883 = vmatprep.subr.bf16.mxu0 0
        %884 = vmatpush1.bf16.msra.mxu0 0
        %885 = vmatprep.subr.bf16.mxu0 0
        %886 = vmatpush1.bf16.msra.mxu0 0
        %887 = vmatprep.subr.bf16.mxu0 0
        %888 = vmatpush1.bf16.msra.mxu0 0
        %889 = vmatprep.subr.bf16.mxu0 0
        %890 = vmatpush1.bf16.msra.mxu0 0
        %891 = vmatprep.subr.bf16.mxu0 0
        %892 = vmatpush1.bf16.msra.mxu0 0
        %893 = vmatprep.subr.bf16.mxu0 0
        %894 = vmatpush1.bf16.msra.mxu0 0
        %895 = vmatprep.subr.bf16.mxu0 0
        %896 = vmatpush1.bf16.msra.mxu0 0
        %897 = vmatprep.subr.bf16.mxu0 0
        %898 = vmatpush1.bf16.msra.mxu0 0
        %899 = vmatprep.subr.bf16.mxu0 0
        %900 = vmatpush1.bf16.msra.mxu0 0
        %901 = vmatprep.subr.bf16.mxu0 0
        %902 = vmatpush1.bf16.msra.mxu0 0
        %903 = vmatprep.subr.bf16.mxu0 0
        %904 = vmatpush1.bf16.msra.mxu0 0
        %905 = vmatprep.subr.bf16.mxu0 0
        %906 = vmatpush1.bf16.msra.mxu0 0
        %907 = vmatprep.mubr.bf16.mxu0 0
        %908 = vmatmul.mubr.bf16.gmra.mrb[0].mxu0 %v779
        %v909 = vpop.f32.mrb[0].mxu0
        %v910 = vadd.f32 %v393, %v909
        %v911 = vpop.f32.mrb[0].mxu0
        %v912 = vpop.f32.mrb[0].mxu0
        %v913 = vpop.f32.mrb[0].mxu0
        %914 = vdwg.mxu0
        %v915 = vmul.f32 %v867, %v910
        %v916 = vadd.f32 %v776, %v915
        %v917 = vtanh.pop %v916
        %v918 = vsub.f32 1.0, %v874
        %v919 = vmul.f32 %v918, %v917
        %v920 = vmul.f32 %v874, %v765
        %v921 = vadd.f32 %v919, %v920
        %s922 = scalar_lea.vmem %s231, 6 [#allocation8]
        %923 = vst.msk [vmem:[%s922] sm:$0x3] %vm454, %v921
        %924 = vst.msk [vmem:[#allocation2] sm:$0x3] %vm454, %v921
        %s925 = sand.u32 %s119, 1
        %s926 = scalar_lea.sflag [#allocation5], %s925
        %s927 = sand.u32 %s119, 1
        %s928 = smul.addr %s927, 8
        %s929 = scalar_lea.vmem [#allocation8], %s928
        // Predicated region
        $region49: #{tpu_custom_call.1} parent=35 // pred_check
          %p930 = pneg %p129
        $region50: #{tpu_custom_call.1} parent=35 // pred_check_branch
          %932 = sbr.rel (%p930) target = $region52
        $region51: #{tpu_custom_call.1} parent=35 // pred_region
          %s933 = smul.u32 4, %s22
          %s935 = ssub.s32 128, 128
          %936 = vsyncadd %s926, %s935
          %s937 = smul.addr %s933, 32
          %s938 = scalar_lea.hbm %s4, %s937
          %s939 = sshll.u32 %s929, 4
          %s940 = int_to_ptr.vmem [resolvable:$true] %s939
          %945 = dma.vmem_to_hbm [thread:$0]  %s940, 128, %s938, %s926, 32, 32, 2
        $region52: #{tpu_custom_call.1} parent=35 // pred_fallthru
          _
      $region36: #{tpu_custom_call.1} parent=5 // pred_fallthru
        _
      %p946 = scmp.le.s32.totalorder 2, %s17
      // Predicated region
      $region53: #{tpu_custom_call.1} parent=5 // pred_check
        %p947 = pneg %p946
      $region54: #{tpu_custom_call.1} parent=5 // pred_check_branch
        %949 = sbr.rel (%p947) target = $region56
      $region55: #{tpu_custom_call.1} parent=5 // pred_region
        %s950 = ssub.s32 %s17, 2
        // Predicated region
        $region57: #{tpu_custom_call.1} parent=55 // pred_check
          %p951 = pneg %p135
        $region58: #{tpu_custom_call.1} parent=55 // pred_check_branch
          %953 = sbr.rel (%p951) target = $region60
        $region59: #{tpu_custom_call.1} parent=55 // pred_region
          %s954 = sand.u32 %s120, 1
          %s955 = scalar_lea.sflag [#allocation5], %s954
          %s956 = sand.u32 %s120, 1
          %s957 = smul.addr %s956, 8
          %s958 = scalar_lea.vmem [#allocation8], %s957
          %959 = dma.done %s955, 128
        $region60: #{tpu_custom_call.1} parent=55 // pred_fallthru
          _
      $region56: #{tpu_custom_call.1} parent=5 // pred_fallthru
        _
    $region6: #{tpu_custom_call.1} parent=1 // loop_footer
      %s21 = sadd.s32 1, %s17
    $region7: #{tpu_custom_call.1} parent=1 // loop_footer_branch
      %16 = sbr.rel target = $region3
    $region8: #{tpu_custom_call.1} parent=1 // loop_exit
      _
    %960 = vsyncpa [#allocation4], 1
    %s961 = scalar_lea.sflag [#allocation4], 1
    %962 = vsyncpa %s961, 1
    %963 = vsyncpa [#allocation7], 1
    %964 = vsyncpa [#allocation5], 1
    %s965 = scalar_lea.sflag [#allocation5], 1
    %966 = vsyncpa %s965, 1

</llo_original>
